<compile_context>
chip_gen: v7x
topology: tpu7x:2x2x1
jax: 0.10.0
libtpu: 0.0.40
codegen_flags: <defaults>
</compile_context>

<pallas_src>
import functools

import jax
import jax.numpy as jnp
from jax.experimental import pallas as pl
from jax.experimental.pallas import tpu as pltpu

LANE = 128      # vreg lane width
SUBLANE = 8     # f32 sublane count


def _round_up(n, m):
    return ((n + m - 1) // m) * m


def _cdiv(a, b):
    return -(-a // b)


def _fused_kan_kernel(x_ref, *refs):
    """Whole MultiLayerKAN forward on one batch tile.

    refs = (wc0, ws0, b0, wc1, ws1, b1, ..., o_ref) where wc/ws are bf16
    [in_pad, out_pad] and b is f32 [1, out_pad].
    """
    o_ref = refs[-1]
    prm = refs[:-1]
    n_layers = len(prm) // 3

    h = x_ref[...].astype(jnp.float32)
    for l in range(n_layers):
        wc_ref = prm[3 * l]
        ws_ref = prm[3 * l + 1]
        b_ref = prm[3 * l + 2]
        # f32 transcendentals (EUP), cast each half to bf16 BEFORE the matmul
        # (no concatenated f32 temp), two MXU dots with f32 accumulation.
        cos_b = jnp.cos(h).astype(jnp.bfloat16)
        sin_b = jnp.sin(h).astype(jnp.bfloat16)
        h = (jnp.dot(cos_b, wc_ref[...], preferred_element_type=jnp.float32)
             + jnp.dot(sin_b, ws_ref[...], preferred_element_type=jnp.float32)
             + b_ref[...])
    o_ref[...] = h.astype(o_ref.dtype)


def prepare_fused_params(params):
    """Pad every layer's feature axes to lane (128) multiples, cast weights to
    bf16 and zero-pad the bias.  Call ONCE and reuse across forward calls.

    Zero padding is exact: padded input features are 0, so cos(0)=1 hits a
    zero weight row and sin(0)=0 contributes nothing; padded output columns
    (zero weights + zero bias) stay exactly 0 and feed the next layer the
    same way.
    """
    fused = []
    for (wc, ws, bias) in params:
        in_dim, out_dim = wc.shape
        in_pad = _round_up(in_dim, LANE)
        out_pad = _round_up(out_dim, LANE)
        wc_p = (jnp.zeros((in_pad, out_pad), jnp.float32)
                .at[:in_dim, :out_dim].set(wc).astype(jnp.bfloat16))
        ws_p = (jnp.zeros((in_pad, out_pad), jnp.float32)
                .at[:in_dim, :out_dim].set(ws).astype(jnp.bfloat16))
        b_p = jnp.zeros((1, out_pad), jnp.float32).at[:, :out_dim].set(bias)
        fused.append((wc_p, ws_p, b_p))
    return fused


@functools.partial(jax.jit, static_argnames=("out_dim_final", "block_m_max"))
def multilayer_kan_forward(x, fused_params, *, out_dim_final, block_m_max=512):
    """Forward pass of MultiLayerKAN ('fourier') as one fused Pallas kernel.

    x:            [B, in_dim] float32
    fused_params: output of prepare_fused_params(params) — built once outside.
    """
    B, in_dim = x.shape
    in0_pad = fused_params[0][0].shape[0]
    out_pad_final = fused_params[-1][0].shape[1]

    # --- batch tiling: tiles divide the (8-aligned) batch evenly; produce at
    # least 2 tiles when possible so the parallel axis shards across both
    # TensorCores on v7x and DMA pipelines against compute. ---
    B8 = _round_up(B, SUBLANE)
    min_tiles = 2 if B8 >= 2 * SUBLANE else 1
    num_tiles = max(_cdiv(B8, block_m_max), min_tiles)
    block_m = _round_up(_cdiv(B8, num_tiles), SUBLANE)
    num_tiles = _cdiv(B8, block_m)
    B_pad = num_tiles * block_m

    x_p = jnp.zeros((B_pad, in0_pad), x.dtype).at[:B, :in_dim].set(x)

    flat_params = []
    in_specs = [pl.BlockSpec((block_m, in0_pad), lambda i: (i, 0))]   # x batch tile
    for (wc, ws, b) in fused_params:
        flat_params.extend([wc, ws, b])
        # Weights / biases are VMEM-resident for the whole grid (constant index_map).
        in_specs.append(pl.BlockSpec(wc.shape, lambda i: (0, 0)))
        in_specs.append(pl.BlockSpec(ws.shape, lambda i: (0, 0)))
        in_specs.append(pl.BlockSpec(b.shape, lambda i: (0, 0)))

    # --- explicit VMEM budget (weights + biases double-buffered worst case,
    # x / out tiles double-buffered, plus per-layer intermediates), with
    # headroom; clamped to [32 MiB, 128 MiB]. ---
    budget = 0
    max_feat = in0_pad
    for (wc, ws, b) in fused_params:
        budget += 2 * (wc.size + ws.size) * 2        # bf16 weights, x2 buffers
        budget += 2 * b.size * 4                     # f32 bias,    x2 buffers
        max_feat = max(max_feat, wc.shape[0], wc.shape[1])
    budget += 2 * block_m * in0_pad * 4              # x tile
    budget += 2 * block_m * out_pad_final * 4        # out tile
    budget += 6 * block_m * max_feat * 4             # h / cos / sin intermediates
    vmem_limit = int(min(128 * 1024 * 1024, max(32 * 1024 * 1024, budget * 2)))

    out = pl.pallas_call(
        _fused_kan_kernel,
        out_shape=jax.ShapeDtypeStruct((B_pad, out_pad_final), x.dtype),
        grid_spec=pltpu.PrefetchScalarGridSpec(
            num_scalar_prefetch=0,
            grid=(num_tiles,),
            in_specs=in_specs,
            out_specs=pl.BlockSpec((block_m, out_pad_final), lambda i: (i, 0)),
        ),
        compiler_params=pltpu.CompilerParams(
            dimension_semantics=("parallel",),
            vmem_limit_bytes=vmem_limit,
        ),
    )(x_p, *flat_params)

    return out[:B, :out_dim_final]


def init_multilayer_kan_params(key, layer_sizes):
    """Matches NaiveFourierKANLayer.__init__ (gridsize=1, smooth_initialization=False):
    coeffs ~ N(0,1) / (sqrt(in_dim) * grid_norm_factor), grid_norm_factor = sqrt(1) = 1,
    bias = zeros(1, out_dim)."""
    params = []
    for i in range(len(layer_sizes) - 1):
        in_dim, out_dim = layer_sizes[i], layer_sizes[i + 1]
        key, kc, ks = jax.random.split(key, 3)
        scale = 1.0 / jnp.sqrt(jnp.float32(in_dim))
        wc = jax.random.normal(kc, (in_dim, out_dim), jnp.float32) * scale
        ws = jax.random.normal(ks, (in_dim, out_dim), jnp.float32) * scale
        bias = jnp.zeros((1, out_dim), jnp.float32)
        params.append((wc, ws, bias))
    return params


def multilayer_kan_reference(x, params):
    """Pure f32 reference (PyTorch-equivalent math)."""
    for (wc, ws, bias) in params:
        x = jnp.cos(x) @ wc + jnp.sin(x) @ ws + bias
    return x


def multilayer_kan_reference_bf16(x, params):
    """Reference with the same bf16-operand / f32-accumulate arithmetic as the kernel."""
    for (wc, ws, bias) in params:
        c = jnp.cos(x).astype(jnp.bfloat16)
        s = jnp.sin(x).astype(jnp.bfloat16)
        x = (jnp.dot(c, wc.astype(jnp.bfloat16), preferred_element_type=jnp.float32)
             + jnp.dot(s, ws.astype(jnp.bfloat16), preferred_element_type=jnp.float32)
             + bias)
    return x


if __name__ == "__main__":
    key = jax.random.PRNGKey(0)
    layer_sizes = [32, 64, 16]   # MultiLayerKAN(layer_sizes, args='fourier')
    batch = 16

    kx, kp = jax.random.split(key)
    x = jax.random.normal(kx, (batch, layer_sizes[0]), jnp.float32)
    params = init_multilayer_kan_params(kp, layer_sizes)

    # Weight padding / bf16 packing is done ONCE, outside the jitted forward.
    fused_params = prepare_fused_params(params)

    out = multilayer_kan_forward(x, fused_params, out_dim_final=layer_sizes[-1])
    out = jax.block_until_ready(out)
    assert out.shape == (batch, layer_sizes[-1])

    # Arithmetic-matched check (bf16 matmul operands, f32 accumulation) -> tight tolerance.
    ref_bf16 = multilayer_kan_reference_bf16(x, params)
    assert jnp.allclose(out, ref_bf16, atol=2e-3, rtol=2e-3), "mismatch vs bf16-matched reference"

    # Semantic check vs full-f32 math (looser: bf16 operands on the MXU).
    ref_f32 = multilayer_kan_reference(x, params)
    assert jnp.allclose(out, ref_f32, atol=1e-1, rtol=1e-1), "mismatch vs f32 reference"

    print("KERNEL_OK")
</pallas_src>

<mosaic_0001>
module attributes {stable_mosaic.version = 11 : i64} {
  func.func @_fused_kan_kernel(%arg0: i32, %arg1: memref<8x128xf32, #tpu.memory_space<vmem>>, %arg2: memref<128x128xbf16, #tpu.memory_space<vmem>>, %arg3: memref<128x128xbf16, #tpu.memory_space<vmem>>, %arg4: memref<1x128xf32, #tpu.memory_space<vmem>>, %arg5: memref<128x128xbf16, #tpu.memory_space<vmem>>, %arg6: memref<128x128xbf16, #tpu.memory_space<vmem>>, %arg7: memref<1x128xf32, #tpu.memory_space<vmem>>, %arg8: memref<8x128xf32, #tpu.memory_space<vmem>>) attributes {dimension_semantics = [#tpu.dimension_semantics<parallel>], iteration_bounds = array<i64: 2>, scalar_prefetch = 0 : i64, scratch_operands = 0 : i64, tpu.core_type = #tpu.core_type<tc>, window_params = [{transform_indices = @transform_0, window_bounds = array<i64: 8, 128>}, {pipeline_mode = #tpu.pipeline_mode<synchronous>, transform_indices = @transform_1, window_bounds = array<i64: 128, 128>}, {pipeline_mode = #tpu.pipeline_mode<synchronous>, transform_indices = @transform_2, window_bounds = array<i64: 128, 128>}, {pipeline_mode = #tpu.pipeline_mode<synchronous>, transform_indices = @transform_3, window_bounds = array<i64: 1, 128>}, {pipeline_mode = #tpu.pipeline_mode<synchronous>, transform_indices = @transform_4, window_bounds = array<i64: 128, 128>}, {pipeline_mode = #tpu.pipeline_mode<synchronous>, transform_indices = @transform_5, window_bounds = array<i64: 128, 128>}, {pipeline_mode = #tpu.pipeline_mode<synchronous>, transform_indices = @transform_6, window_bounds = array<i64: 1, 128>}, {transform_indices = @transform_7, window_bounds = array<i64: 8, 128>}]} {
    %c0 = arith.constant 0 : index
    %c0_0 = arith.constant 0 : index
    %0 = vector.load %arg1[%c0, %c0_0] : memref<8x128xf32, #tpu.memory_space<vmem>>, vector<8x128xf32>
    %1 = math.cos %0 : vector<8x128xf32>
    %2 = arith.truncf %1 : vector<8x128xf32> to vector<8x128xbf16>
    %3 = math.sin %0 : vector<8x128xf32>
    %4 = arith.truncf %3 : vector<8x128xf32> to vector<8x128xbf16>
    %c0_1 = arith.constant 0 : index
    %c0_2 = arith.constant 0 : index
    %5 = vector.load %arg2[%c0_1, %c0_2] : memref<128x128xbf16, #tpu.memory_space<vmem>>, vector<128x128xbf16>
    %cst = arith.constant dense<0.000000e+00> : vector<8x128xf32>
    %6 = tpu.matmul %2, %5, %cst {dimension_numbers = #tpu.dot_dimension_numbers<[1], [0], [0], [1], [0, 0, 1, 1], [], []>} : vector<8x128xbf16>, vector<128x128xbf16>, vector<8x128xf32> -> vector<8x128xf32>
    %c0_3 = arith.constant 0 : index
    %c0_4 = arith.constant 0 : index
    %7 = vector.load %arg3[%c0_3, %c0_4] : memref<128x128xbf16, #tpu.memory_space<vmem>>, vector<128x128xbf16>
    %cst_5 = arith.constant dense<0.000000e+00> : vector<8x128xf32>
    %8 = tpu.matmul %4, %7, %cst_5 {dimension_numbers = #tpu.dot_dimension_numbers<[1], [0], [0], [1], [0, 0, 1, 1], [], []>} : vector<8x128xbf16>, vector<128x128xbf16>, vector<8x128xf32> -> vector<8x128xf32>
    %9 = arith.addf %6, %8 : vector<8x128xf32>
    %c0_6 = arith.constant 0 : index
    %c0_7 = arith.constant 0 : index
    %10 = vector.load %arg4[%c0_6, %c0_7] : memref<1x128xf32, #tpu.memory_space<vmem>>, vector<1x128xf32>
    %11 = vector.broadcast %10 : vector<1x128xf32> to vector<8x128xf32>
    %12 = arith.addf %9, %11 : vector<8x128xf32>
    %13 = math.cos %12 : vector<8x128xf32>
    %14 = arith.truncf %13 : vector<8x128xf32> to vector<8x128xbf16>
    %15 = math.sin %12 : vector<8x128xf32>
    %16 = arith.truncf %15 : vector<8x128xf32> to vector<8x128xbf16>
    %c0_8 = arith.constant 0 : index
    %c0_9 = arith.constant 0 : index
    %17 = vector.load %arg5[%c0_8, %c0_9] : memref<128x128xbf16, #tpu.memory_space<vmem>>, vector<128x128xbf16>
    %cst_10 = arith.constant dense<0.000000e+00> : vector<8x128xf32>
    %18 = tpu.matmul %14, %17, %cst_10 {dimension_numbers = #tpu.dot_dimension_numbers<[1], [0], [0], [1], [0, 0, 1, 1], [], []>} : vector<8x128xbf16>, vector<128x128xbf16>, vector<8x128xf32> -> vector<8x128xf32>
    %c0_11 = arith.constant 0 : index
    %c0_12 = arith.constant 0 : index
    %19 = vector.load %arg6[%c0_11, %c0_12] : memref<128x128xbf16, #tpu.memory_space<vmem>>, vector<128x128xbf16>
    %cst_13 = arith.constant dense<0.000000e+00> : vector<8x128xf32>
    %20 = tpu.matmul %16, %19, %cst_13 {dimension_numbers = #tpu.dot_dimension_numbers<[1], [0], [0], [1], [0, 0, 1, 1], [], []>} : vector<8x128xbf16>, vector<128x128xbf16>, vector<8x128xf32> -> vector<8x128xf32>
    %21 = arith.addf %18, %20 : vector<8x128xf32>
    %c0_14 = arith.constant 0 : index
    %c0_15 = arith.constant 0 : index
    %22 = vector.load %arg7[%c0_14, %c0_15] : memref<1x128xf32, #tpu.memory_space<vmem>>, vector<1x128xf32>
    %23 = vector.broadcast %22 : vector<1x128xf32> to vector<8x128xf32>
    %24 = arith.addf %21, %23 : vector<8x128xf32>
    %c0_16 = arith.constant 0 : index
    %c0_17 = arith.constant 0 : index
    %25 = vector.load %arg8[%c0_16, %c0_17] : memref<8x128xf32, #tpu.memory_space<vmem>>, vector<8x128xf32>
    tpu.vector_store %arg8[%c0_16, %c0_17], %24 {strides = array<i32>} : memref<8x128xf32, #tpu.memory_space<vmem>>, vector<8x128xf32>,
    return
  }
  func.func @transform_0(%arg0: i32) -> (i32, i32) {
    %c0_i32 = arith.constant 0 : i32
    %c0_i32_0 = arith.constant 0 : i32
    return %arg0, %c0_i32 : i32, i32
  }
  func.func @transform_1(%arg0: i32) -> (i32, i32) {
    %c0_i32 = arith.constant 0 : i32
    %c0_i32_0 = arith.constant 0 : i32
    %c0_i32_1 = arith.constant 0 : i32
    return %c0_i32, %c0_i32_0 : i32, i32
  }
  func.func @transform_2(%arg0: i32) -> (i32, i32) {
    %c0_i32 = arith.constant 0 : i32
    %c0_i32_0 = arith.constant 0 : i32
    %c0_i32_1 = arith.constant 0 : i32
    return %c0_i32, %c0_i32_0 : i32, i32
  }
  func.func @transform_3(%arg0: i32) -> (i32, i32) {
    %c0_i32 = arith.constant 0 : i32
    %c0_i32_0 = arith.constant 0 : i32
    %c0_i32_1 = arith.constant 0 : i32
    return %c0_i32, %c0_i32_0 : i32, i32
  }
  func.func @transform_4(%arg0: i32) -> (i32, i32) {
    %c0_i32 = arith.constant 0 : i32
    %c0_i32_0 = arith.constant 0 : i32
    %c0_i32_1 = arith.constant 0 : i32
    return %c0_i32, %c0_i32_0 : i32, i32
  }
  func.func @transform_5(%arg0: i32) -> (i32, i32) {
    %c0_i32 = arith.constant 0 : i32
    %c0_i32_0 = arith.constant 0 : i32
    %c0_i32_1 = arith.constant 0 : i32
    return %c0_i32, %c0_i32_0 : i32, i32
  }
  func.func @transform_6(%arg0: i32) -> (i32, i32) {
    %c0_i32 = arith.constant 0 : i32
    %c0_i32_0 = arith.constant 0 : i32
    %c0_i32_1 = arith.constant 0 : i32
    return %c0_i32, %c0_i32_0 : i32, i32
  }
  func.func @transform_7(%arg0: i32) -> (i32, i32) {
    %c0_i32 = arith.constant 0 : i32
    %c0_i32_0 = arith.constant 0 : i32
    return %arg0, %c0_i32 : i32, i32
  }
}

</mosaic_0001>

<llo_original>
// kernel: multilayer_kan_forward.1
$region0: #{multilayer_kan_forward.1}
  #allocation0 [shape = 'u32[]', space=smem, size = 0x4, offset = 0x4, fixed_abs, tag = 'smem constant byte address 0x4 - core index']
  #allocation1 [shape = 'u32[144,128]{1,0:T(1,128)}', space=vmem, size = 0x12000, scoped, tag = 'internal scratch']
  %s0 = inlined_call_operand.vmem [shape: f32[16,128], index: 0, kind: input, shape index: {}]
  %s1 = inlined_call_operand.vmem [shape: bf16[128,128], index: 1, kind: input, shape index: {}]
  %s2 = inlined_call_operand.hbm [shape: bf16[128,128], index: 2, kind: input, shape index: {}]
  %s3 = inlined_call_operand.vmem [shape: f32[1,128], index: 3, kind: input, shape index: {}]
  %s4 = inlined_call_operand.hbm [shape: bf16[128,128], index: 4, kind: input, shape index: {}]
  %s5 = inlined_call_operand.hbm [shape: bf16[128,128], index: 5, kind: input, shape index: {}]
  %s6 = inlined_call_operand.vmem [shape: f32[1,128], index: 6, kind: input, shape index: {}]
  %s7 = inlined_call_operand.hbm [shape: f32[16,128], index: 7, kind: output, shape index: {}]
  %s8 = sld [smem:[#allocation0]]
  $region73: #{multilayer_kan_forward.1} parent=0
    _
  %s10 = ssub.s32 1, %s8
  %s11 = scalar_select 0, %s10, %s8
  $region1: #{multilayer_kan_forward.1} parent=0
    #allocation2 [shape = 'u8[32768]{0}', space=vmem, size = 0x8000, scoped, tag = 'input window, operand 2, single buffered']
    #allocation3 [shape = 's32[2]{0}', space=sflag, size = 0x8, scoped, tag = 'scoped memory for multilayer_kan_forward.1']
    #allocation4 [shape = 's32[2]{0}', space=sflag, size = 0x8, scoped, tag = 'scoped memory for multilayer_kan_forward.1']
    #allocation5 [shape = 'u8[32768]{0}', space=vmem, size = 0x8000, scoped, tag = 'input window, operand 4, single buffered']
    #allocation6 [shape = 's32[1]{0}', space=sflag, size = 0x4, scoped, tag = 'scoped memory for multilayer_kan_forward.1']
    #allocation7 [shape = 'u8[32768]{0}', space=vmem, size = 0x8000, scoped, tag = 'input window, operand 5, single buffered']
    #allocation8 [shape = 'u8[8192]{0}', space=vmem, size = 0x2000, scoped, tag = 'output window, operand 0']
    %12 = vsyncpa [#allocation3], 0
    %13 = vsyncpa [#allocation6], 0
    %14 = vsyncpa [#allocation4], 0
    %s15 = scalar_lea.sflag [#allocation4], 1
    %16 = vsyncpa %s15, 0
    loop: start=0, step=1, limit=4
    $region2: #{multilayer_kan_forward.1} parent=1 // loop_pre_header
      _
    $region3: #{multilayer_kan_forward.1} parent=1 // loop_header
      %s18 = sphi 0, %s22
      %p19 = scmp.ge.s32.totalorder %s18, 4
      %s28 = sphi 0, %s30
      %s31 = sphi 0, %s28
      %s32 = sphi 0, %s31
      %s48 = sphi 0, %s32
      %s52 = sphi 0, %s52
      %s54 = sphi 0, %s52
      %s55 = sphi 0, %s54
      %s69 = sphi 0, %s55
      %s73 = sphi 0, %s73
      %s75 = sphi 0, %s73
      %s76 = sphi 0, %s75
      %s90 = sphi 0, %s76
      %s94 = sphi 0, %s94
      %s96 = sphi 0, %s94
      %s97 = sphi 0, %s96
      %s111 = sphi 0, %s97
      %s115 = sphi 0, %s115
      %s117 = sphi 0, %s115
      %s118 = sphi 0, %s117
      %s132 = sphi 0, %s118
      %s136 = sphi 0, %s136
      %s138 = sphi 0, %s136
      %s139 = sphi 0, %s138
      %s153 = sphi 0, %s139
      %s157 = sphi 0, %s157
      %s159 = sphi 0, %s157
      %s160 = sphi 0, %s159
      %s174 = sphi 0, %s160
      %s180 = sphi 0, %s182
      %s183 = sphi 0, %s180
      %s184 = sphi 0, %s183
      %s200 = sphi 0, %s184
    $region4: #{multilayer_kan_forward.1} parent=1 // loop_header_branch
      %21 = sbr.rel (%p19) target = $region8
    $region5: #{multilayer_kan_forward.1} parent=1 // loop_body
      %s23 = ssub.s32 %s18, 1
      %s24 = ssub.s32 %s18, 2
      %s25 = sadd.s32 %s18, 1
      %s26 = ssub.s32 %s18, %s25
      %p27 = scmp.eq.s32.totalorder %s26, 0
      %s29 = sadd.s32 %s28, 1
      %s30 = scalar_select %p27, %s28, %s29
      %p33 = pneg %p27
      %p34 = scmp.eq.s32.totalorder %s18, 1
      %p35 = por %p33, %p34
      %p36 = scmp.ne.s32.totalorder %s28, %s31
      %p37 = scmp.eq.s32.totalorder %s18, 0
      %p38 = por %p36, %p37
      %p39 = scmp.ne.s32.totalorder %s28, %s31
      %p40 = scmp.eq.s32.totalorder %s23, 1
      %p41 = por %p39, %p40
      %p42 = scmp.ne.s32.totalorder %s31, %s32
      %p43 = scmp.eq.s32.totalorder %s23, 0
      %p44 = por %p42, %p43
      %p45 = scmp.ne.s32.totalorder %s31, %s32
      %p46 = scmp.eq.s32.totalorder %s24, 1
      %p47 = por %p45, %p46
      %p49 = scmp.ne.s32.totalorder %s32, %s48
      %p50 = scmp.eq.s32.totalorder %s24, 0
      %p51 = por %p49, %p50
      %s53 = sadd.s32 %s52, 1
      %p56 = scmp.eq.s32.totalorder %s18, 1
      %p57 = scmp.ne.s32.totalorder %s52, %s54
      %p58 = scmp.eq.s32.totalorder %s18, 0
      %p59 = por %p57, %p58
      %p60 = scmp.ne.s32.totalorder %s52, %s54
      %p61 = scmp.eq.s32.totalorder %s23, 1
      %p62 = por %p60, %p61
      %p63 = scmp.ne.s32.totalorder %s54, %s55
      %p64 = scmp.eq.s32.totalorder %s23, 0
      %p65 = por %p63, %p64
      %p66 = scmp.ne.s32.totalorder %s54, %s55
      %p67 = scmp.eq.s32.totalorder %s24, 1
      %p68 = por %p66, %p67
      %p70 = scmp.ne.s32.totalorder %s55, %s69
      %p71 = scmp.eq.s32.totalorder %s24, 0
      %p72 = por %p70, %p71
      %s74 = sadd.s32 %s73, 1
      %p77 = scmp.eq.s32.totalorder %s18, 1
      %p78 = scmp.ne.s32.totalorder %s73, %s75
      %p79 = scmp.eq.s32.totalorder %s18, 0
      %p80 = por %p78, %p79
      %p81 = scmp.ne.s32.totalorder %s73, %s75
      %p82 = scmp.eq.s32.totalorder %s23, 1
      %p83 = por %p81, %p82
      %p84 = scmp.ne.s32.totalorder %s75, %s76
      %p85 = scmp.eq.s32.totalorder %s23, 0
      %p86 = por %p84, %p85
      %p87 = scmp.ne.s32.totalorder %s75, %s76
      %p88 = scmp.eq.s32.totalorder %s24, 1
      %p89 = por %p87, %p88
      %p91 = scmp.ne.s32.totalorder %s76, %s90
      %p92 = scmp.eq.s32.totalorder %s24, 0
      %p93 = por %p91, %p92
      %s95 = sadd.s32 %s94, 1
      %p98 = scmp.eq.s32.totalorder %s18, 1
      %p99 = scmp.ne.s32.totalorder %s94, %s96
      %p100 = scmp.eq.s32.totalorder %s18, 0
      %p101 = por %p99, %p100
      %p102 = scmp.ne.s32.totalorder %s94, %s96
      %p103 = scmp.eq.s32.totalorder %s23, 1
      %p104 = por %p102, %p103
      %p105 = scmp.ne.s32.totalorder %s96, %s97
      %p106 = scmp.eq.s32.totalorder %s23, 0
      %p107 = por %p105, %p106
      %p108 = scmp.ne.s32.totalorder %s96, %s97
      %p109 = scmp.eq.s32.totalorder %s24, 1
      %p110 = por %p108, %p109
      %p112 = scmp.ne.s32.totalorder %s97, %s111
      %p113 = scmp.eq.s32.totalorder %s24, 0
      %p114 = por %p112, %p113
      %s116 = sadd.s32 %s115, 1
      %p119 = scmp.eq.s32.totalorder %s18, 1
      %p120 = scmp.ne.s32.totalorder %s115, %s117
      %p121 = scmp.eq.s32.totalorder %s18, 0
      %p122 = por %p120, %p121
      %p123 = scmp.ne.s32.totalorder %s115, %s117
      %p124 = scmp.eq.s32.totalorder %s23, 1
      %p125 = por %p123, %p124
      %p126 = scmp.ne.s32.totalorder %s117, %s118
      %p127 = scmp.eq.s32.totalorder %s23, 0
      %p128 = por %p126, %p127
      %p129 = scmp.ne.s32.totalorder %s117, %s118
      %p130 = scmp.eq.s32.totalorder %s24, 1
      %p131 = por %p129, %p130
      %p133 = scmp.ne.s32.totalorder %s118, %s132
      %p134 = scmp.eq.s32.totalorder %s24, 0
      %p135 = por %p133, %p134
      %s137 = sadd.s32 %s136, 1
      %p140 = scmp.eq.s32.totalorder %s18, 1
      %p141 = scmp.ne.s32.totalorder %s136, %s138
      %p142 = scmp.eq.s32.totalorder %s18, 0
      %p143 = por %p141, %p142
      %p144 = scmp.ne.s32.totalorder %s136, %s138
      %p145 = scmp.eq.s32.totalorder %s23, 1
      %p146 = por %p144, %p145
      %p147 = scmp.ne.s32.totalorder %s138, %s139
      %p148 = scmp.eq.s32.totalorder %s23, 0
      %p149 = por %p147, %p148
      %p150 = scmp.ne.s32.totalorder %s138, %s139
      %p151 = scmp.eq.s32.totalorder %s24, 1
      %p152 = por %p150, %p151
      %p154 = scmp.ne.s32.totalorder %s139, %s153
      %p155 = scmp.eq.s32.totalorder %s24, 0
      %p156 = por %p154, %p155
      %s158 = sadd.s32 %s157, 1
      %p161 = scmp.eq.s32.totalorder %s18, 1
      %p162 = scmp.ne.s32.totalorder %s157, %s159
      %p163 = scmp.eq.s32.totalorder %s18, 0
      %p164 = por %p162, %p163
      %p165 = scmp.ne.s32.totalorder %s157, %s159
      %p166 = scmp.eq.s32.totalorder %s23, 1
      %p167 = por %p165, %p166
      %p168 = scmp.ne.s32.totalorder %s159, %s160
      %p169 = scmp.eq.s32.totalorder %s23, 0
      %p170 = por %p168, %p169
      %p171 = scmp.ne.s32.totalorder %s159, %s160
      %p172 = scmp.eq.s32.totalorder %s24, 1
      %p173 = por %p171, %p172
      %p175 = scmp.ne.s32.totalorder %s160, %s174
      %p176 = scmp.eq.s32.totalorder %s24, 0
      %p177 = por %p175, %p176
      %s178 = ssub.s32 %s18, %s25
      %p179 = scmp.eq.s32.totalorder %s178, 0
      %s181 = sadd.s32 %s180, 1
      %s182 = scalar_select %p179, %s180, %s181
      %p185 = pneg %p179
      %p186 = scmp.eq.s32.totalorder %s18, 1
      %p187 = por %p185, %p186
      %p188 = scmp.ne.s32.totalorder %s180, %s183
      %p189 = scmp.eq.s32.totalorder %s18, 0
      %p190 = por %p188, %p189
      %p191 = scmp.ne.s32.totalorder %s180, %s183
      %p192 = scmp.eq.s32.totalorder %s23, 1
      %p193 = por %p191, %p192
      %p194 = scmp.ne.s32.totalorder %s183, %s184
      %p195 = scmp.eq.s32.totalorder %s23, 0
      %p196 = por %p194, %p195
      %p197 = scmp.ne.s32.totalorder %s183, %s184
      %p198 = scmp.eq.s32.totalorder %s24, 1
      %p199 = por %p197, %p198
      %p201 = scmp.ne.s32.totalorder %s184, %s200
      %p202 = scmp.eq.s32.totalorder %s24, 0
      %p203 = por %p201, %p202
      %p204 = scmp.le.s32.totalorder 1, %s18
      %p205 = scmp.lt.s32.totalorder %s18, 3
      %p206 = pnand %p204, %p205
      %p207 = pneg %p206
      // Predicated region
      $region9: #{multilayer_kan_forward.1} parent=5 // pred_check
        _
      $region10: #{multilayer_kan_forward.1} parent=5 // pred_check_branch
        %209 = sbr.rel (%p206) target = $region12
      $region11: #{multilayer_kan_forward.1} parent=5 // pred_region
        %s210 = ssub.s32 %s18, 1
        // Predicated region
        $region13: #{multilayer_kan_forward.1} parent=11 // pred_check
          %p211 = pneg %p65
        $region14: #{multilayer_kan_forward.1} parent=11 // pred_check_branch
          %213 = sbr.rel (%p211) target = $region16
        $region15: #{multilayer_kan_forward.1} parent=11 // pred_region
          _
        $region16: #{multilayer_kan_forward.1} parent=11 // pred_fallthru
          _
        // Predicated region
        $region17: #{multilayer_kan_forward.1} parent=11 // pred_check
          %p214 = pneg %p86
        $region18: #{multilayer_kan_forward.1} parent=11 // pred_check_branch
          %216 = sbr.rel (%p214) target = $region20
        $region19: #{multilayer_kan_forward.1} parent=11 // pred_region
          %s218 = ssub.s32 1024, 1024
          %219 = vsyncadd [#allocation3], %s218
          %s220 = sshll.u32 [#allocation2], 4
          %s221 = int_to_ptr.vmem [resolvable:$true] %s220
          %226 = dma.hbm_to_vmem [thread:$0]  %s2, 1024, %s221, [#allocation3], 64, 64, 4
        $region20: #{multilayer_kan_forward.1} parent=11 // pred_fallthru
          _
        // Predicated region
        $region21: #{multilayer_kan_forward.1} parent=11 // pred_check
          %p227 = pneg %p107
        $region22: #{multilayer_kan_forward.1} parent=11 // pred_check_branch
          %229 = sbr.rel (%p227) target = $region24
        $region23: #{multilayer_kan_forward.1} parent=11 // pred_region
          _
        $region24: #{multilayer_kan_forward.1} parent=11 // pred_fallthru
          _
        // Predicated region
        $region25: #{multilayer_kan_forward.1} parent=11 // pred_check
          %p230 = pneg %p128
        $region26: #{multilayer_kan_forward.1} parent=11 // pred_check_branch
          %232 = sbr.rel (%p230) target = $region28
        $region27: #{multilayer_kan_forward.1} parent=11 // pred_region
          %s234 = ssub.s32 1024, 1024
          %235 = vsyncadd [#allocation6], %s234
          %s236 = sshll.u32 [#allocation5], 4
          %s237 = int_to_ptr.vmem [resolvable:$true] %s236
          %242 = dma.hbm_to_vmem [thread:$0]  %s4, 1024, %s237, [#allocation6], 64, 64, 4
        $region28: #{multilayer_kan_forward.1} parent=11 // pred_fallthru
          _
        // Predicated region
        $region29: #{multilayer_kan_forward.1} parent=11 // pred_check
          %p243 = pneg %p149
        $region30: #{multilayer_kan_forward.1} parent=11 // pred_check_branch
          %245 = sbr.rel (%p243) target = $region32
        $region31: #{multilayer_kan_forward.1} parent=11 // pred_region
          %s247 = ssub.s32 1024, 1024
          %248 = vsyncadd [#allocation6], %s247
          %s249 = sshll.u32 [#allocation7], 4
          %s250 = int_to_ptr.vmem [resolvable:$true] %s249
          %255 = dma.hbm_to_vmem [thread:$0]  %s5, 1024, %s250, [#allocation6], 64, 64, 4
        $region32: #{multilayer_kan_forward.1} parent=11 // pred_fallthru
          _
        // Predicated region
        $region33: #{multilayer_kan_forward.1} parent=11 // pred_check
          %p256 = pneg %p170
        $region34: #{multilayer_kan_forward.1} parent=11 // pred_check_branch
          %258 = sbr.rel (%p256) target = $region36
        $region35: #{multilayer_kan_forward.1} parent=11 // pred_region
          _
        $region36: #{multilayer_kan_forward.1} parent=11 // pred_fallthru
          _
      $region12: #{multilayer_kan_forward.1} parent=5 // pred_fallthru
        _
      %p259 = scmp.lt.s32.totalorder %s18, 2
      // Predicated region
      $region37: #{multilayer_kan_forward.1} parent=5 // pred_check
        %p260 = pneg %p259
      $region38: #{multilayer_kan_forward.1} parent=5 // pred_check_branch
        %262 = sbr.rel (%p260) target = $region40
      $region39: #{multilayer_kan_forward.1} parent=5 // pred_region
        // Predicated region
        $region41: #{multilayer_kan_forward.1} parent=39 // pred_check
          %p263 = pneg %p38
        $region42: #{multilayer_kan_forward.1} parent=39 // pred_check_branch
          %265 = sbr.rel (%p263) target = $region44
        $region43: #{multilayer_kan_forward.1} parent=39 // pred_region
          %p266 = scmp.lt.s32.totalorder %s18, 1
          %s267 = scalar_select %p266, %s18, 1
          %s268 = smul.addr %s267, 8
          %s269 = scalar_lea.vmem %s0, %s268
        $region44: #{multilayer_kan_forward.1} parent=39 // pred_fallthru
          _
      $region40: #{multilayer_kan_forward.1} parent=5 // pred_fallthru
        _
      %p270 = scmp.le.s32.totalorder 1, %s18
      %p271 = scmp.lt.s32.totalorder %s18, 3
      %p272 = pnand %p270, %p271
      %p273 = pneg %p272
      // Predicated region
      $region45: #{multilayer_kan_forward.1} parent=5 // pred_check
        _
      $region46: #{multilayer_kan_forward.1} parent=5 // pred_check_branch
        %275 = sbr.rel (%p272) target = $region48
      $region47: #{multilayer_kan_forward.1} parent=5 // pred_region
        %s276 = ssub.s32 %s18, 1
        // Predicated region
        $region49: #{multilayer_kan_forward.1} parent=47 // pred_check
          %p277 = pneg %p86
        $region50: #{multilayer_kan_forward.1} parent=47 // pred_check_branch
          %279 = sbr.rel (%p277) target = $region52
        $region51: #{multilayer_kan_forward.1} parent=47 // pred_region
          %280 = dma.done [#allocation3], 1024
        $region52: #{multilayer_kan_forward.1} parent=47 // pred_fallthru
          _
        // Predicated region
        $region53: #{multilayer_kan_forward.1} parent=47 // pred_check
          %p281 = pneg %p128
        $region54: #{multilayer_kan_forward.1} parent=47 // pred_check_branch
          %283 = sbr.rel (%p281) target = $region56
        $region55: #{multilayer_kan_forward.1} parent=47 // pred_region
          %284 = dma.done [#allocation6], 1024
        $region56: #{multilayer_kan_forward.1} parent=47 // pred_fallthru
          _
        // Predicated region
        $region57: #{multilayer_kan_forward.1} parent=47 // pred_check
          %p285 = pneg %p149
        $region58: #{multilayer_kan_forward.1} parent=47 // pred_check_branch
          %287 = sbr.rel (%p285) target = $region60
        $region59: #{multilayer_kan_forward.1} parent=47 // pred_region
          %288 = dma.done [#allocation6], 1024
        $region60: #{multilayer_kan_forward.1} parent=47 // pred_fallthru
          _
        %p289 = scmp.lt.s32.totalorder %s23, 1
        %s290 = scalar_select %p289, %s23, 1
        %s291 = smul.addr %s290, 8
        %s292 = scalar_lea.vmem %s0, %s291
        %p293 = pneg %p44
        %p294 = pneg %p41
        %p295 = pneg %p65
        %p296 = pneg %p62
        %p297 = pneg %p86
        %p298 = pneg %p83
        %p299 = pneg %p107
        %p300 = pneg %p104
        %p301 = pneg %p128
        %p302 = pneg %p125
        %p303 = pneg %p149
        %p304 = pneg %p146
        %p305 = pneg %p170
        %p306 = pneg %p167
        %p307 = pneg %p196
        %p308 = pneg %p193
        %s309 = sand.u32 %s183, 1
        %s310 = scalar_lea.sflag [#allocation4], %s309
        %s311 = sand.u32 %s183, 1
        %s312 = smul.addr %s311, 8
        %s313 = scalar_lea.vmem [#allocation8], %s312
        %p314 = scmp.lt.s32.totalorder %s23, 1
        %s315 = scalar_select %p314, %s23, 1
        %s316 = smul.addr %s315, 8
        %s317 = scalar_lea.vmem %s0, %s316
        %v319 = vld [vmem:[%s317] sm:$0xff]
        %v320 = vand.u32 2147483647, %v319
        %vm321 = vcmp.le.f32.partialorder %v320, 0.7853982
        %vm322 = vcmp.lt.s32.totalorder %v319, 0
        %v323 = vand.u32 %v319, 2139095040
        %v324 = vshrl.u32 %v323, 23
        %v325 = vsub.s32 %v324, 127
        %v326 = vand.u32 2147483647, %v319
        %v327 = vand.u32 %v326, 8388607
        %v328 = vor.u32 %v327, 8388608
        %v329 = vsub.s32 0, %v328
        %v330 = vadd.s32 %v325, 1
        %vm331 = vcmp.gt.s32.totalorder %v330, 0
        %v332 = vsel %vm331, %v330, 0
        %v333 = vshrl.u32 %v332, 5
        %v334 = vand.u32 %v332, 31
        %v335 = vsub.s32 32, %v334
        %v336 = vshrl.u32 683565275, %v335
        %v337 = vshll.u32 683565275, %v334
        %v338 = vshrl.u32 2475754826, %v335
        %v339 = vor.u32 %v337, %v338
        %v340 = vshll.u32 2475754826, %v334
        %v341 = vshrl.u32 2131351028, %v335
        %v342 = vor.u32 %v340, %v341
        %v343 = vshll.u32 2131351028, %v334
        %v344 = vshrl.u32 2102212464, %v335
        %v345 = vor.u32 %v343, %v344
        %v346 = vshll.u32 2102212464, %v334
        %v347 = vshrl.u32 920167782, %v335
        %v348 = vor.u32 %v346, %v347
        %v349 = vshll.u32 920167782, %v334
        %v350 = vshrl.u32 1326507024, %v335
        %v351 = vor.u32 %v349, %v350
        %vm352 = vcmp.lt.s32.totalorder %v333, 1
        %vm353 = vcmp.lt.s32.totalorder %v333, 2
        %vm354 = vcmp.lt.s32.totalorder %v333, 3
        %vm355 = vcmp.lt.s32.totalorder %v333, 4
        %v356 = vsel %vm352, %v336, %v339
        %v357 = vsel %vm355, %v345, 2102212464
        %v358 = vsel %vm354, %v342, %v357
        %v359 = vsel %vm353, %v356, %v358
        %v360 = vsel %vm352, %v339, %v342
        %v361 = vsel %vm355, %v348, 920167782
        %v362 = vsel %vm354, %v345, %v361
        %v363 = vsel %vm353, %v360, %v362
        %v364 = vsel %vm352, %v342, %v345
        %v365 = vsel %vm355, %v351, 1326507024
        %v366 = vsel %vm354, %v348, %v365
        %v367 = vsel %vm353, %v364, %v366
        %v368 = vshll.u32 %v328, 8
        %v369 = vmul.u32.u64.compose %v368, %v367
        %v370 = vextract.low.u32 %v369
        %v371 = vextract.high.u32 %v369
        %v372 = vmul.u32.u64.compose %v368, %v363
        %v373 = vextract.low.u32 %v372
        %v374 = vextract.high.u32 %v372
        %v375 = vmul.u32 %v368, %v359
        %v376 = vadd.s32 %v371, %v373
        %vm377 = vc.u32 %v371, %v373
        %v378 = vadd.s32 %v374, 1
        %v379 = vsel %vm377, %v378, %v374
        %v380 = vadd.s32 %v375, %v379
        %v381 = vadd.s32 %v380, 536870912
        %v382 = vshrl.u32 %v381, 30
        %v383 = vshll.u32 %v382, 30
        %v384 = vsub.s32 %v380, %v383
        %vm385 = vcmp.lt.s32.totalorder %v384, 0
        %v386 = vsub.s32 0, %v384
        %v387 = vsel %vm385, %v386, %v384
        %v388 = vclz %v387
        %v389 = vsub.s32 %v388, 2
        %vm390 = vcmp.gt.s32.totalorder 0, %v389
        %v391 = vsel %vm390, 0, %v389
        %v392 = vsub.s32 32, %v391
        %v393 = vshll.u32 %v384, %v391
        %v394 = vshrl.u32 %v376, %v392
        %v395 = vor.u32 %v393, %v394
        %v396 = vsub.s32 4294967266, %v391
        %v397 = vadd.s32 %v396, 127
        %v398 = vshll.u32 %v397, 23
        %v399 = vor.u32 4788187, %v398
        %v400 = vand.u32 2147483647, %v399
        %v402 = vcvt.s32.f32 %v395
        %v403 = vmul.f32 %v402, %v400
        %v404 = vxor.u32 %v403, 2147483648
        %v405 = vsel %vm322, %v404, %v403
        %v406 = vsub.s32 4, %v382
        %v407 = vsel %vm322, %v406, %v382
        %v408 = vsel %vm321, %v319, %v405
        %v409 = vsel %vm321, 0, %v407
        %v410 = vcosq.f32.pop %v408
        %v411 = vsinq.f32.pop %v408
        %vm412 = vweird.f32 %v319
        %v413 = vand.u32 %v409, 3
        %vm414 = vcmp.lt.s32.totalorder %v413, 2
        %vm415 = vcmp.eq.s32.totalorder %v413, 0
        %v416 = vxor.u32 %v411, 2147483648
        %v417 = vsel %vm415, %v410, %v416
        %vm418 = vcmp.eq.s32.totalorder %v413, 2
        %v419 = vxor.u32 %v410, 2147483648
        %v420 = vsel %vm418, %v419, %v411
        %v421 = vsel %vm414, %v417, %v420
        %v422 = vsel %vm412, nan, %v421
        %v423 = vpack.c.bf16 %v422, %v422
        %v424 = vand.u32 2147483647, %v319
        %vm425 = vcmp.le.f32.partialorder %v424, 0.7853982
        %vm426 = vcmp.lt.s32.totalorder %v319, 0
        %v427 = vand.u32 %v319, 2139095040
        %v428 = vshrl.u32 %v427, 23
        %v429 = vsub.s32 %v428, 127
        %v430 = vand.u32 2147483647, %v319
        %v431 = vand.u32 %v430, 8388607
        %v432 = vor.u32 %v431, 8388608
        %v433 = vsub.s32 0, %v432
        %v434 = vadd.s32 %v429, 1
        %vm435 = vcmp.gt.s32.totalorder %v434, 0
        %v436 = vsel %vm435, %v434, 0
        %v437 = vshrl.u32 %v436, 5
        %v438 = vand.u32 %v436, 31
        %v439 = vsub.s32 32, %v438
        %v440 = vshrl.u32 683565275, %v439
        %v441 = vshll.u32 683565275, %v438
        %v442 = vshrl.u32 2475754826, %v439
        %v443 = vor.u32 %v441, %v442
        %v444 = vshll.u32 2475754826, %v438
        %v445 = vshrl.u32 2131351028, %v439
        %v446 = vor.u32 %v444, %v445
        %v447 = vshll.u32 2131351028, %v438
        %v448 = vshrl.u32 2102212464, %v439
        %v449 = vor.u32 %v447, %v448
        %v450 = vshll.u32 2102212464, %v438
        %v451 = vshrl.u32 920167782, %v439
        %v452 = vor.u32 %v450, %v451
        %v453 = vshll.u32 920167782, %v438
        %v454 = vshrl.u32 1326507024, %v439
        %v455 = vor.u32 %v453, %v454
        %vm456 = vcmp.lt.s32.totalorder %v437, 1
        %vm457 = vcmp.lt.s32.totalorder %v437, 2
        %vm458 = vcmp.lt.s32.totalorder %v437, 3
        %vm459 = vcmp.lt.s32.totalorder %v437, 4
        %v460 = vsel %vm456, %v440, %v443
        %v461 = vsel %vm459, %v449, 2102212464
        %v462 = vsel %vm458, %v446, %v461
        %v463 = vsel %vm457, %v460, %v462
        %v464 = vsel %vm456, %v443, %v446
        %v465 = vsel %vm459, %v452, 920167782
        %v466 = vsel %vm458, %v449, %v465
        %v467 = vsel %vm457, %v464, %v466
        %v468 = vsel %vm456, %v446, %v449
        %v469 = vsel %vm459, %v455, 1326507024
        %v470 = vsel %vm458, %v452, %v469
        %v471 = vsel %vm457, %v468, %v470
        %v472 = vshll.u32 %v432, 8
        %v473 = vmul.u32.u64.compose %v472, %v471
        %v474 = vextract.low.u32 %v473
        %v475 = vextract.high.u32 %v473
        %v476 = vmul.u32.u64.compose %v472, %v467
        %v477 = vextract.low.u32 %v476
        %v478 = vextract.high.u32 %v476
        %v479 = vmul.u32 %v472, %v463
        %v480 = vadd.s32 %v475, %v477
        %vm481 = vc.u32 %v475, %v477
        %v482 = vadd.s32 %v478, 1
        %v483 = vsel %vm481, %v482, %v478
        %v484 = vadd.s32 %v479, %v483
        %v485 = vadd.s32 %v484, 536870912
        %v486 = vshrl.u32 %v485, 30
        %v487 = vshll.u32 %v486, 30
        %v488 = vsub.s32 %v484, %v487
        %vm489 = vcmp.lt.s32.totalorder %v488, 0
        %v490 = vsub.s32 0, %v488
        %v491 = vsel %vm489, %v490, %v488
        %v492 = vclz %v491
        %v493 = vsub.s32 %v492, 2
        %vm494 = vcmp.gt.s32.totalorder 0, %v493
        %v495 = vsel %vm494, 0, %v493
        %v496 = vsub.s32 32, %v495
        %v497 = vshll.u32 %v488, %v495
        %v498 = vshrl.u32 %v480, %v496
        %v499 = vor.u32 %v497, %v498
        %v500 = vsub.s32 4294967266, %v495
        %v501 = vadd.s32 %v500, 127
        %v502 = vshll.u32 %v501, 23
        %v503 = vor.u32 4788187, %v502
        %v504 = vand.u32 2147483647, %v503
        %v506 = vcvt.s32.f32 %v499
        %v507 = vmul.f32 %v506, %v504
        %v508 = vxor.u32 %v507, 2147483648
        %v509 = vsel %vm426, %v508, %v507
        %v510 = vsub.s32 4, %v486
        %v511 = vsel %vm426, %v510, %v486
        %v512 = vsel %vm425, %v319, %v509
        %v513 = vsel %vm425, 0, %v511
        %v514 = vcosq.f32.pop %v512
        %v515 = vsinq.f32.pop %v512
        %vm516 = vweird.f32 %v319
        %v517 = vadd.s32 %v513, 3
        %v518 = vand.u32 %v517, 3
        %vm519 = vcmp.lt.s32.totalorder %v518, 2
        %vm520 = vcmp.eq.s32.totalorder %v518, 0
        %v521 = vxor.u32 %v515, 2147483648
        %v522 = vsel %vm520, %v514, %v521
        %vm523 = vcmp.eq.s32.totalorder %v518, 2
        %v524 = vxor.u32 %v514, 2147483648
        %v525 = vsel %vm523, %v524, %v515
        %v526 = vsel %vm519, %v522, %v525
        %v527 = vsel %vm516, nan, %v526
        %v528 = vpack.c.bf16 %v527, %v527
        %v529 = vld [vmem:[%s1] sm:$0xf]
        %v530 = vld [vmem:[%s1 + $0x4] sm:$0xf]
        %v531 = vld [vmem:[%s1 + $0x8] sm:$0xf]
        %v532 = vld [vmem:[%s1 + $0xc] sm:$0xf]
        %v533 = vld [vmem:[%s1 + $0x10] sm:$0xf]
        %v534 = vld [vmem:[%s1 + $0x14] sm:$0xf]
        %v535 = vld [vmem:[%s1 + $0x18] sm:$0xf]
        %v536 = vld [vmem:[%s1 + $0x1c] sm:$0xf]
        %v537 = vld [vmem:[%s1 + $0x20] sm:$0xf]
        %v538 = vld [vmem:[%s1 + $0x24] sm:$0xf]
        %v539 = vld [vmem:[%s1 + $0x28] sm:$0xf]
        %v540 = vld [vmem:[%s1 + $0x2c] sm:$0xf]
        %v541 = vld [vmem:[%s1 + $0x30] sm:$0xf]
        %v542 = vld [vmem:[%s1 + $0x34] sm:$0xf]
        %v543 = vld [vmem:[%s1 + $0x38] sm:$0xf]
        %v544 = vld [vmem:[%s1 + $0x3c] sm:$0xf]
        %v545 = vld [vmem:[#allocation2] sm:$0xf]
        %v546 = vld [vmem:[#allocation2 + $0x4] sm:$0xf]
        %v547 = vld [vmem:[#allocation2 + $0x8] sm:$0xf]
        %v548 = vld [vmem:[#allocation2 + $0xc] sm:$0xf]
        %v549 = vld [vmem:[#allocation2 + $0x10] sm:$0xf]
        %v550 = vld [vmem:[#allocation2 + $0x14] sm:$0xf]
        %v551 = vld [vmem:[#allocation2 + $0x18] sm:$0xf]
        %v552 = vld [vmem:[#allocation2 + $0x1c] sm:$0xf]
        %v553 = vld [vmem:[#allocation2 + $0x20] sm:$0xf]
        %v554 = vld [vmem:[#allocation2 + $0x24] sm:$0xf]
        %v555 = vld [vmem:[#allocation2 + $0x28] sm:$0xf]
        %v556 = vld [vmem:[#allocation2 + $0x2c] sm:$0xf]
        %v557 = vld [vmem:[#allocation2 + $0x30] sm:$0xf]
        %v558 = vld [vmem:[#allocation2 + $0x34] sm:$0xf]
        %v559 = vld [vmem:[#allocation2 + $0x38] sm:$0xf]
        %v560 = vld [vmem:[#allocation2 + $0x3c] sm:$0xf]
        %v577 = vunpack.c.l.b16 %v545
        %v578 = vunpack.c.l.b16 %v546
        %v579 = vunpack.c.l.b16 %v547
        %v580 = vunpack.c.l.b16 %v548
        %v581 = vunpack.c.l.b16 %v549
        %v582 = vunpack.c.l.b16 %v550
        %v583 = vunpack.c.l.b16 %v551
        %v584 = vunpack.c.l.b16 %v552
        %v585 = vunpack.c.l.b16 %v553
        %v586 = vunpack.c.l.b16 %v554
        %v587 = vunpack.c.l.b16 %v555
        %v588 = vunpack.c.l.b16 %v556
        %v589 = vunpack.c.l.b16 %v557
        %v590 = vunpack.c.l.b16 %v558
        %v591 = vunpack.c.l.b16 %v559
        %v592 = vunpack.c.l.b16 %v560
        %v593 = vpack.c.b16 %v578, %v577
        %v594 = vpack.c.b16 %v580, %v579
        %v595 = vpack.c.b16 %v582, %v581
        %v596 = vpack.c.b16 %v584, %v583
        %v597 = vpack.c.b16 %v586, %v585
        %v598 = vpack.c.b16 %v588, %v587
        %v599 = vpack.c.b16 %v590, %v589
        %v600 = vpack.c.b16 %v592, %v591
        %609 = vmatprep.subr.bf16.mxu0 0
        %610 = vmatpush1.bf16.msra.mxu0 %v593
        %611 = vmatprep.subr.bf16.mxu0 0
        %612 = vmatpush1.bf16.msra.mxu0 %v594
        %613 = vmatprep.subr.bf16.mxu0 0
        %614 = vmatpush1.bf16.msra.mxu0 %v595
        %615 = vmatprep.subr.bf16.mxu0 0
        %616 = vmatpush1.bf16.msra.mxu0 %v596
        %617 = vmatprep.subr.bf16.mxu0 0
        %618 = vmatpush1.bf16.msra.mxu0 %v597
        %619 = vmatprep.subr.bf16.mxu0 0
        %620 = vmatpush1.bf16.msra.mxu0 %v598
        %621 = vmatprep.subr.bf16.mxu0 0
        %622 = vmatpush1.bf16.msra.mxu0 %v599
        %623 = vmatprep.subr.bf16.mxu0 0
        %624 = vmatpush1.bf16.msra.mxu0 %v600
        %625 = vmatprep.subr.bf16.mxu0 0
        %626 = vmatpush1.bf16.msra.mxu0 0
        %627 = vmatprep.subr.bf16.mxu0 0
        %628 = vmatpush1.bf16.msra.mxu0 0
        %629 = vmatprep.subr.bf16.mxu0 0
        %630 = vmatpush1.bf16.msra.mxu0 0
        %631 = vmatprep.subr.bf16.mxu0 0
        %632 = vmatpush1.bf16.msra.mxu0 0
        %633 = vmatprep.subr.bf16.mxu0 0
        %634 = vmatpush1.bf16.msra.mxu0 0
        %635 = vmatprep.subr.bf16.mxu0 0
        %636 = vmatpush1.bf16.msra.mxu0 0
        %637 = vmatprep.subr.bf16.mxu0 0
        %638 = vmatpush1.bf16.msra.mxu0 0
        %639 = vmatprep.subr.bf16.mxu0 0
        %640 = vmatpush1.bf16.msra.mxu0 0
        %641 = vmatprep.mubr.bf16.mxu0 0
        %642 = vmatmul.mubr.bf16.gmra.mrb[0].mxu0 %v528
        %v643 = vpop.f32.mrb[0].mxu0
        %v644 = vadd.f32 0.0, %v643
        %v645 = vpop.f32.mrb[0].mxu0
        %v646 = vpop.f32.mrb[0].mxu0
        %v647 = vpop.f32.mrb[0].mxu0
        %648 = vdwg.mxu0
        %v665 = vunpack.c.l.b16 %v529
        %v666 = vunpack.c.l.b16 %v530
        %v667 = vunpack.c.l.b16 %v531
        %v668 = vunpack.c.l.b16 %v532
        %v669 = vunpack.c.l.b16 %v533
        %v670 = vunpack.c.l.b16 %v534
        %v671 = vunpack.c.l.b16 %v535
        %v672 = vunpack.c.l.b16 %v536
        %v673 = vunpack.c.l.b16 %v537
        %v674 = vunpack.c.l.b16 %v538
        %v675 = vunpack.c.l.b16 %v539
        %v676 = vunpack.c.l.b16 %v540
        %v677 = vunpack.c.l.b16 %v541
        %v678 = vunpack.c.l.b16 %v542
        %v679 = vunpack.c.l.b16 %v543
        %v680 = vunpack.c.l.b16 %v544
        %v681 = vpack.c.b16 %v666, %v665
        %v682 = vpack.c.b16 %v668, %v667
        %v683 = vpack.c.b16 %v670, %v669
        %v684 = vpack.c.b16 %v672, %v671
        %v685 = vpack.c.b16 %v674, %v673
        %v686 = vpack.c.b16 %v676, %v675
        %v687 = vpack.c.b16 %v678, %v677
        %v688 = vpack.c.b16 %v680, %v679
        %697 = vmatprep.subr.bf16.mxu0 0
        %698 = vmatpush1.bf16.msra.mxu0 %v681
        %699 = vmatprep.subr.bf16.mxu0 0
        %700 = vmatpush1.bf16.msra.mxu0 %v682
        %701 = vmatprep.subr.bf16.mxu0 0
        %702 = vmatpush1.bf16.msra.mxu0 %v683
        %703 = vmatprep.subr.bf16.mxu0 0
        %704 = vmatpush1.bf16.msra.mxu0 %v684
        %705 = vmatprep.subr.bf16.mxu0 0
        %706 = vmatpush1.bf16.msra.mxu0 %v685
        %707 = vmatprep.subr.bf16.mxu0 0
        %708 = vmatpush1.bf16.msra.mxu0 %v686
        %709 = vmatprep.subr.bf16.mxu0 0
        %710 = vmatpush1.bf16.msra.mxu0 %v687
        %711 = vmatprep.subr.bf16.mxu0 0
        %712 = vmatpush1.bf16.msra.mxu0 %v688
        %713 = vmatprep.subr.bf16.mxu0 0
        %714 = vmatpush1.bf16.msra.mxu0 0
        %715 = vmatprep.subr.bf16.mxu0 0
        %716 = vmatpush1.bf16.msra.mxu0 0
        %717 = vmatprep.subr.bf16.mxu0 0
        %718 = vmatpush1.bf16.msra.mxu0 0
        %719 = vmatprep.subr.bf16.mxu0 0
        %720 = vmatpush1.bf16.msra.mxu0 0
        %721 = vmatprep.subr.bf16.mxu0 0
        %722 = vmatpush1.bf16.msra.mxu0 0
        %723 = vmatprep.subr.bf16.mxu0 0
        %724 = vmatpush1.bf16.msra.mxu0 0
        %725 = vmatprep.subr.bf16.mxu0 0
        %726 = vmatpush1.bf16.msra.mxu0 0
        %727 = vmatprep.subr.bf16.mxu0 0
        %728 = vmatpush1.bf16.msra.mxu0 0
        %729 = vmatprep.mubr.bf16.mxu0 0
        %730 = vmatmul.mubr.bf16.gmra.mrb[0].mxu0 %v423
        %v731 = vpop.f32.mrb[0].mxu0
        %v732 = vadd.f32 %v644, %v731
        %v733 = vpop.f32.mrb[0].mxu0
        %v734 = vpop.f32.mrb[0].mxu0
        %v735 = vpop.f32.mrb[0].mxu0
        %736 = vdwg.mxu0
        %v737 = vld [vmem:[%s3] sm:$0x1]
        %v739 = vlaneseq
        %v740 = vshrl.u32 %v739, 7
        %v741 = vsub.s32 0, %v740
        %v742 = vrot.slane %v737, %v741
        %v744 = vadd.f32 %v732, %v742
        %v745 = vand.u32 2147483647, %v744
        %vm746 = vcmp.le.f32.partialorder %v745, 0.7853982
        %vm747 = vcmp.lt.s32.totalorder %v744, 0
        %v748 = vand.u32 %v744, 2139095040
        %v749 = vshrl.u32 %v748, 23
        %v750 = vsub.s32 %v749, 127
        %v751 = vand.u32 2147483647, %v744
        %v752 = vand.u32 %v751, 8388607
        %v753 = vor.u32 %v752, 8388608
        %v754 = vsub.s32 0, %v753
        %v755 = vadd.s32 %v750, 1
        %vm756 = vcmp.gt.s32.totalorder %v755, 0
        %v757 = vsel %vm756, %v755, 0
        %v758 = vshrl.u32 %v757, 5
        %v759 = vand.u32 %v757, 31
        %v760 = vsub.s32 32, %v759
        %v761 = vshrl.u32 683565275, %v760
        %v762 = vshll.u32 683565275, %v759
        %v763 = vshrl.u32 2475754826, %v760
        %v764 = vor.u32 %v762, %v763
        %v765 = vshll.u32 2475754826, %v759
        %v766 = vshrl.u32 2131351028, %v760
        %v767 = vor.u32 %v765, %v766
        %v768 = vshll.u32 2131351028, %v759
        %v769 = vshrl.u32 2102212464, %v760
        %v770 = vor.u32 %v768, %v769
        %v771 = vshll.u32 2102212464, %v759
        %v772 = vshrl.u32 920167782, %v760
        %v773 = vor.u32 %v771, %v772
        %v774 = vshll.u32 920167782, %v759
        %v775 = vshrl.u32 1326507024, %v760
        %v776 = vor.u32 %v774, %v775
        %vm777 = vcmp.lt.s32.totalorder %v758, 1
        %vm778 = vcmp.lt.s32.totalorder %v758, 2
        %vm779 = vcmp.lt.s32.totalorder %v758, 3
        %vm780 = vcmp.lt.s32.totalorder %v758, 4
        %v781 = vsel %vm777, %v761, %v764
        %v782 = vsel %vm780, %v770, 2102212464
        %v783 = vsel %vm779, %v767, %v782
        %v784 = vsel %vm778, %v781, %v783
        %v785 = vsel %vm777, %v764, %v767
        %v786 = vsel %vm780, %v773, 920167782
        %v787 = vsel %vm779, %v770, %v786
        %v788 = vsel %vm778, %v785, %v787
        %v789 = vsel %vm777, %v767, %v770
        %v790 = vsel %vm780, %v776, 1326507024
        %v791 = vsel %vm779, %v773, %v790
        %v792 = vsel %vm778, %v789, %v791
        %v793 = vshll.u32 %v753, 8
        %v794 = vmul.u32.u64.compose %v793, %v792
        %v795 = vextract.low.u32 %v794
        %v796 = vextract.high.u32 %v794
        %v797 = vmul.u32.u64.compose %v793, %v788
        %v798 = vextract.low.u32 %v797
        %v799 = vextract.high.u32 %v797
        %v800 = vmul.u32 %v793, %v784
        %v801 = vadd.s32 %v796, %v798
        %vm802 = vc.u32 %v796, %v798
        %v803 = vadd.s32 %v799, 1
        %v804 = vsel %vm802, %v803, %v799
        %v805 = vadd.s32 %v800, %v804
        %v806 = vadd.s32 %v805, 536870912
        %v807 = vshrl.u32 %v806, 30
        %v808 = vshll.u32 %v807, 30
        %v809 = vsub.s32 %v805, %v808
        %vm810 = vcmp.lt.s32.totalorder %v809, 0
        %v811 = vsub.s32 0, %v809
        %v812 = vsel %vm810, %v811, %v809
        %v813 = vclz %v812
        %v814 = vsub.s32 %v813, 2
        %vm815 = vcmp.gt.s32.totalorder 0, %v814
        %v816 = vsel %vm815, 0, %v814
        %v817 = vsub.s32 32, %v816
        %v818 = vshll.u32 %v809, %v816
        %v819 = vshrl.u32 %v801, %v817
        %v820 = vor.u32 %v818, %v819
        %v821 = vsub.s32 4294967266, %v816
        %v822 = vadd.s32 %v821, 127
        %v823 = vshll.u32 %v822, 23
        %v824 = vor.u32 4788187, %v823
        %v825 = vand.u32 2147483647, %v824
        %v827 = vcvt.s32.f32 %v820
        %v828 = vmul.f32 %v827, %v825
        %v829 = vxor.u32 %v828, 2147483648
        %v830 = vsel %vm747, %v829, %v828
        %v831 = vsub.s32 4, %v807
        %v832 = vsel %vm747, %v831, %v807
        %v833 = vsel %vm746, %v744, %v830
        %v834 = vsel %vm746, 0, %v832
        %v835 = vcosq.f32.pop %v833
        %v836 = vsinq.f32.pop %v833
        %vm837 = vweird.f32 %v744
        %v838 = vand.u32 %v834, 3
        %vm839 = vcmp.lt.s32.totalorder %v838, 2
        %vm840 = vcmp.eq.s32.totalorder %v838, 0
        %v841 = vxor.u32 %v836, 2147483648
        %v842 = vsel %vm840, %v835, %v841
        %vm843 = vcmp.eq.s32.totalorder %v838, 2
        %v844 = vxor.u32 %v835, 2147483648
        %v845 = vsel %vm843, %v844, %v836
        %v846 = vsel %vm839, %v842, %v845
        %v847 = vsel %vm837, nan, %v846
        %v848 = vpack.c.bf16 %v847, %v847
        %v849 = vand.u32 2147483647, %v744
        %vm850 = vcmp.le.f32.partialorder %v849, 0.7853982
        %vm851 = vcmp.lt.s32.totalorder %v744, 0
        %v852 = vand.u32 %v744, 2139095040
        %v853 = vshrl.u32 %v852, 23
        %v854 = vsub.s32 %v853, 127
        %v855 = vand.u32 2147483647, %v744
        %v856 = vand.u32 %v855, 8388607
        %v857 = vor.u32 %v856, 8388608
        %v858 = vsub.s32 0, %v857
        %v859 = vadd.s32 %v854, 1
        %vm860 = vcmp.gt.s32.totalorder %v859, 0
        %v861 = vsel %vm860, %v859, 0
        %v862 = vshrl.u32 %v861, 5
        %v863 = vand.u32 %v861, 31
        %v864 = vsub.s32 32, %v863
        %v865 = vshrl.u32 683565275, %v864
        %v866 = vshll.u32 683565275, %v863
        %v867 = vshrl.u32 2475754826, %v864
        %v868 = vor.u32 %v866, %v867
        %v869 = vshll.u32 2475754826, %v863
        %v870 = vshrl.u32 2131351028, %v864
        %v871 = vor.u32 %v869, %v870
        %v872 = vshll.u32 2131351028, %v863
        %v873 = vshrl.u32 2102212464, %v864
        %v874 = vor.u32 %v872, %v873
        %v875 = vshll.u32 2102212464, %v863
        %v876 = vshrl.u32 920167782, %v864
        %v877 = vor.u32 %v875, %v876
        %v878 = vshll.u32 920167782, %v863
        %v879 = vshrl.u32 1326507024, %v864
        %v880 = vor.u32 %v878, %v879
        %vm881 = vcmp.lt.s32.totalorder %v862, 1
        %vm882 = vcmp.lt.s32.totalorder %v862, 2
        %vm883 = vcmp.lt.s32.totalorder %v862, 3
        %vm884 = vcmp.lt.s32.totalorder %v862, 4
        %v885 = vsel %vm881, %v865, %v868
        %v886 = vsel %vm884, %v874, 2102212464
        %v887 = vsel %vm883, %v871, %v886
        %v888 = vsel %vm882, %v885, %v887
        %v889 = vsel %vm881, %v868, %v871
        %v890 = vsel %vm884, %v877, 920167782
        %v891 = vsel %vm883, %v874, %v890
        %v892 = vsel %vm882, %v889, %v891
        %v893 = vsel %vm881, %v871, %v874
        %v894 = vsel %vm884, %v880, 1326507024
        %v895 = vsel %vm883, %v877, %v894
        %v896 = vsel %vm882, %v893, %v895
        %v897 = vshll.u32 %v857, 8
        %v898 = vmul.u32.u64.compose %v897, %v896
        %v899 = vextract.low.u32 %v898
        %v900 = vextract.high.u32 %v898
        %v901 = vmul.u32.u64.compose %v897, %v892
        %v902 = vextract.low.u32 %v901
        %v903 = vextract.high.u32 %v901
        %v904 = vmul.u32 %v897, %v888
        %v905 = vadd.s32 %v900, %v902
        %vm906 = vc.u32 %v900, %v902
        %v907 = vadd.s32 %v903, 1
        %v908 = vsel %vm906, %v907, %v903
        %v909 = vadd.s32 %v904, %v908
        %v910 = vadd.s32 %v909, 536870912
        %v911 = vshrl.u32 %v910, 30
        %v912 = vshll.u32 %v911, 30
        %v913 = vsub.s32 %v909, %v912
        %vm914 = vcmp.lt.s32.totalorder %v913, 0
        %v915 = vsub.s32 0, %v913
        %v916 = vsel %vm914, %v915, %v913
        %v917 = vclz %v916
        %v918 = vsub.s32 %v917, 2
        %vm919 = vcmp.gt.s32.totalorder 0, %v918
        %v920 = vsel %vm919, 0, %v918
        %v921 = vsub.s32 32, %v920
        %v922 = vshll.u32 %v913, %v920
        %v923 = vshrl.u32 %v905, %v921
        %v924 = vor.u32 %v922, %v923
        %v925 = vsub.s32 4294967266, %v920
        %v926 = vadd.s32 %v925, 127
        %v927 = vshll.u32 %v926, 23
        %v928 = vor.u32 4788187, %v927
        %v929 = vand.u32 2147483647, %v928
        %v931 = vcvt.s32.f32 %v924
        %v932 = vmul.f32 %v931, %v929
        %v933 = vxor.u32 %v932, 2147483648
        %v934 = vsel %vm851, %v933, %v932
        %v935 = vsub.s32 4, %v911
        %v936 = vsel %vm851, %v935, %v911
        %v937 = vsel %vm850, %v744, %v934
        %v938 = vsel %vm850, 0, %v936
        %v939 = vcosq.f32.pop %v937
        %v940 = vsinq.f32.pop %v937
        %vm941 = vweird.f32 %v744
        %v942 = vadd.s32 %v938, 3
        %v943 = vand.u32 %v942, 3
        %vm944 = vcmp.lt.s32.totalorder %v943, 2
        %vm945 = vcmp.eq.s32.totalorder %v943, 0
        %v946 = vxor.u32 %v940, 2147483648
        %v947 = vsel %vm945, %v939, %v946
        %vm948 = vcmp.eq.s32.totalorder %v943, 2
        %v949 = vxor.u32 %v939, 2147483648
        %v950 = vsel %vm948, %v949, %v940
        %v951 = vsel %vm944, %v947, %v950
        %v952 = vsel %vm941, nan, %v951
        %v953 = vpack.c.bf16 %v952, %v952
        %v954 = vld [vmem:[#allocation5] sm:$0xf]
        %v955 = vld [vmem:[#allocation5 + $0x4] sm:$0xf]
        %v956 = vld [vmem:[#allocation5 + $0x8] sm:$0xf]
        %v957 = vld [vmem:[#allocation5 + $0xc] sm:$0xf]
        %v958 = vld [vmem:[#allocation5 + $0x10] sm:$0xf]
        %v959 = vld [vmem:[#allocation5 + $0x14] sm:$0xf]
        %v960 = vld [vmem:[#allocation5 + $0x18] sm:$0xf]
        %v961 = vld [vmem:[#allocation5 + $0x1c] sm:$0xf]
        %v962 = vld [vmem:[#allocation5 + $0x20] sm:$0xf]
        %v963 = vld [vmem:[#allocation5 + $0x24] sm:$0xf]
        %v964 = vld [vmem:[#allocation5 + $0x28] sm:$0xf]
        %v965 = vld [vmem:[#allocation5 + $0x2c] sm:$0xf]
        %v966 = vld [vmem:[#allocation5 + $0x30] sm:$0xf]
        %v967 = vld [vmem:[#allocation5 + $0x34] sm:$0xf]
        %v968 = vld [vmem:[#allocation5 + $0x38] sm:$0xf]
        %v969 = vld [vmem:[#allocation5 + $0x3c] sm:$0xf]
        %v970 = vld [vmem:[#allocation7] sm:$0xf]
        %v971 = vld [vmem:[#allocation7 + $0x4] sm:$0xf]
        %v972 = vld [vmem:[#allocation7 + $0x8] sm:$0xf]
        %v973 = vld [vmem:[#allocation7 + $0xc] sm:$0xf]
        %v974 = vld [vmem:[#allocation7 + $0x10] sm:$0xf]
        %v975 = vld [vmem:[#allocation7 + $0x14] sm:$0xf]
        %v976 = vld [vmem:[#allocation7 + $0x18] sm:$0xf]
        %v977 = vld [vmem:[#allocation7 + $0x1c] sm:$0xf]
        %v978 = vld [vmem:[#allocation7 + $0x20] sm:$0xf]
        %v979 = vld [vmem:[#allocation7 + $0x24] sm:$0xf]
        %v980 = vld [vmem:[#allocation7 + $0x28] sm:$0xf]
        %v981 = vld [vmem:[#allocation7 + $0x2c] sm:$0xf]
        %v982 = vld [vmem:[#allocation7 + $0x30] sm:$0xf]
        %v983 = vld [vmem:[#allocation7 + $0x34] sm:$0xf]
        %v984 = vld [vmem:[#allocation7 + $0x38] sm:$0xf]
        %v985 = vld [vmem:[#allocation7 + $0x3c] sm:$0xf]
        %v1002 = vunpack.c.l.b16 %v970
        %v1003 = vunpack.c.l.b16 %v971
        %v1004 = vunpack.c.l.b16 %v972
        %v1005 = vunpack.c.l.b16 %v973
        %v1006 = vunpack.c.l.b16 %v974
        %v1007 = vunpack.c.l.b16 %v975
        %v1008 = vunpack.c.l.b16 %v976
        %v1009 = vunpack.c.l.b16 %v977
        %v1010 = vunpack.c.l.b16 %v978
        %v1011 = vunpack.c.l.b16 %v979
        %v1012 = vunpack.c.l.b16 %v980
        %v1013 = vunpack.c.l.b16 %v981
        %v1014 = vunpack.c.l.b16 %v982
        %v1015 = vunpack.c.l.b16 %v983
        %v1016 = vunpack.c.l.b16 %v984
        %v1017 = vunpack.c.l.b16 %v985
        %v1018 = vpack.c.b16 %v1003, %v1002
        %v1019 = vpack.c.b16 %v1005, %v1004
        %v1020 = vpack.c.b16 %v1007, %v1006
        %v1021 = vpack.c.b16 %v1009, %v1008
        %v1022 = vpack.c.b16 %v1011, %v1010
        %v1023 = vpack.c.b16 %v1013, %v1012
        %v1024 = vpack.c.b16 %v1015, %v1014
        %v1025 = vpack.c.b16 %v1017, %v1016
        %1034 = vmatprep.subr.bf16.mxu0 0
        %1035 = vmatpush1.bf16.msra.mxu0 %v1018
        %1036 = vmatprep.subr.bf16.mxu0 0
        %1037 = vmatpush1.bf16.msra.mxu0 %v1019
        %1038 = vmatprep.subr.bf16.mxu0 0
        %1039 = vmatpush1.bf16.msra.mxu0 %v1020
        %1040 = vmatprep.subr.bf16.mxu0 0
        %1041 = vmatpush1.bf16.msra.mxu0 %v1021
        %1042 = vmatprep.subr.bf16.mxu0 0
        %1043 = vmatpush1.bf16.msra.mxu0 %v1022
        %1044 = vmatprep.subr.bf16.mxu0 0
        %1045 = vmatpush1.bf16.msra.mxu0 %v1023
        %1046 = vmatprep.subr.bf16.mxu0 0
        %1047 = vmatpush1.bf16.msra.mxu0 %v1024
        %1048 = vmatprep.subr.bf16.mxu0 0
        %1049 = vmatpush1.bf16.msra.mxu0 %v1025
        %1050 = vmatprep.subr.bf16.mxu0 0
        %1051 = vmatpush1.bf16.msra.mxu0 0
        %1052 = vmatprep.subr.bf16.mxu0 0
        %1053 = vmatpush1.bf16.msra.mxu0 0
        %1054 = vmatprep.subr.bf16.mxu0 0
        %1055 = vmatpush1.bf16.msra.mxu0 0
        %1056 = vmatprep.subr.bf16.mxu0 0
        %1057 = vmatpush1.bf16.msra.mxu0 0
        %1058 = vmatprep.subr.bf16.mxu0 0
        %1059 = vmatpush1.bf16.msra.mxu0 0
        %1060 = vmatprep.subr.bf16.mxu0 0
        %1061 = vmatpush1.bf16.msra.mxu0 0
        %1062 = vmatprep.subr.bf16.mxu0 0
        %1063 = vmatpush1.bf16.msra.mxu0 0
        %1064 = vmatprep.subr.bf16.mxu0 0
        %1065 = vmatpush1.bf16.msra.mxu0 0
        %1066 = vmatprep.mubr.bf16.mxu0 0
        %1067 = vmatmul.mubr.bf16.gmra.mrb[0].mxu0 %v953
        %v1068 = vpop.f32.mrb[0].mxu0
        %v1069 = vadd.f32 0.0, %v1068
        %v1070 = vpop.f32.mrb[0].mxu0
        %v1071 = vpop.f32.mrb[0].mxu0
        %v1072 = vpop.f32.mrb[0].mxu0
        %1073 = vdwg.mxu0
        %v1090 = vunpack.c.l.b16 %v954
        %v1091 = vunpack.c.l.b16 %v955
        %v1092 = vunpack.c.l.b16 %v956
        %v1093 = vunpack.c.l.b16 %v957
        %v1094 = vunpack.c.l.b16 %v958
        %v1095 = vunpack.c.l.b16 %v959
        %v1096 = vunpack.c.l.b16 %v960
        %v1097 = vunpack.c.l.b16 %v961
        %v1098 = vunpack.c.l.b16 %v962
        %v1099 = vunpack.c.l.b16 %v963
        %v1100 = vunpack.c.l.b16 %v964
        %v1101 = vunpack.c.l.b16 %v965
        %v1102 = vunpack.c.l.b16 %v966
        %v1103 = vunpack.c.l.b16 %v967
        %v1104 = vunpack.c.l.b16 %v968
        %v1105 = vunpack.c.l.b16 %v969
        %v1106 = vpack.c.b16 %v1091, %v1090
        %v1107 = vpack.c.b16 %v1093, %v1092
        %v1108 = vpack.c.b16 %v1095, %v1094
        %v1109 = vpack.c.b16 %v1097, %v1096
        %v1110 = vpack.c.b16 %v1099, %v1098
        %v1111 = vpack.c.b16 %v1101, %v1100
        %v1112 = vpack.c.b16 %v1103, %v1102
        %v1113 = vpack.c.b16 %v1105, %v1104
        %1122 = vmatprep.subr.bf16.mxu0 0
        %1123 = vmatpush1.bf16.msra.mxu0 %v1106
        %1124 = vmatprep.subr.bf16.mxu0 0
        %1125 = vmatpush1.bf16.msra.mxu0 %v1107
        %1126 = vmatprep.subr.bf16.mxu0 0
        %1127 = vmatpush1.bf16.msra.mxu0 %v1108
        %1128 = vmatprep.subr.bf16.mxu0 0
        %1129 = vmatpush1.bf16.msra.mxu0 %v1109
        %1130 = vmatprep.subr.bf16.mxu0 0
        %1131 = vmatpush1.bf16.msra.mxu0 %v1110
        %1132 = vmatprep.subr.bf16.mxu0 0
        %1133 = vmatpush1.bf16.msra.mxu0 %v1111
        %1134 = vmatprep.subr.bf16.mxu0 0
        %1135 = vmatpush1.bf16.msra.mxu0 %v1112
        %1136 = vmatprep.subr.bf16.mxu0 0
        %1137 = vmatpush1.bf16.msra.mxu0 %v1113
        %1138 = vmatprep.subr.bf16.mxu0 0
        %1139 = vmatpush1.bf16.msra.mxu0 0
        %1140 = vmatprep.subr.bf16.mxu0 0
        %1141 = vmatpush1.bf16.msra.mxu0 0
        %1142 = vmatprep.subr.bf16.mxu0 0
        %1143 = vmatpush1.bf16.msra.mxu0 0
        %1144 = vmatprep.subr.bf16.mxu0 0
        %1145 = vmatpush1.bf16.msra.mxu0 0
        %1146 = vmatprep.subr.bf16.mxu0 0
        %1147 = vmatpush1.bf16.msra.mxu0 0
        %1148 = vmatprep.subr.bf16.mxu0 0
        %1149 = vmatpush1.bf16.msra.mxu0 0
        %1150 = vmatprep.subr.bf16.mxu0 0
        %1151 = vmatpush1.bf16.msra.mxu0 0
        %1152 = vmatprep.subr.bf16.mxu0 0
        %1153 = vmatpush1.bf16.msra.mxu0 0
        %1154 = vmatprep.mubr.bf16.mxu0 0
        %1155 = vmatmul.mubr.bf16.gmra.mrb[0].mxu0 %v848
        %v1156 = vpop.f32.mrb[0].mxu0
        %v1157 = vadd.f32 %v1069, %v1156
        %v1158 = vpop.f32.mrb[0].mxu0
        %v1159 = vpop.f32.mrb[0].mxu0
        %v1160 = vpop.f32.mrb[0].mxu0
        %1161 = vdwg.mxu0
        %v1162 = vld [vmem:[%s6] sm:$0x1]
        %v1164 = vlaneseq
        %v1165 = vshrl.u32 %v1164, 7
        %v1166 = vsub.s32 0, %v1165
        %v1167 = vrot.slane %v1162, %v1166
        %v1169 = vadd.f32 %v1157, %v1167
        %1170 = vst [vmem:[%s313] sm:$0xff] %v1169
        %s1171 = sand.u32 %s183, 1
        %s1172 = scalar_lea.sflag [#allocation4], %s1171
        %s1173 = sand.u32 %s183, 1
        %s1174 = smul.addr %s1173, 8
        %s1175 = scalar_lea.vmem [#allocation8], %s1174
        // Predicated region
        $region61: #{multilayer_kan_forward.1} parent=47 // pred_check
          %p1176 = pneg %p193
        $region62: #{multilayer_kan_forward.1} parent=47 // pred_check_branch
          %1178 = sbr.rel (%p1176) target = $region64
        $region63: #{multilayer_kan_forward.1} parent=47 // pred_region
          %s1180 = ssub.s32 128, 128
          %1181 = vsyncadd %s1172, %s1180
          %s1182 = smul.addr %s23, 128
          %s1183 = scalar_lea.hbm %s7, %s1182
          %s1185 = sshll.u32 %s1175, 4
          %s1186 = int_to_ptr.vmem [resolvable:$true] %s1185
          %1188 = dma.vmem_to_hbm [thread:$0]  %s1186, 128, %s1183, %s1172
        $region64: #{multilayer_kan_forward.1} parent=47 // pred_fallthru
          _
      $region48: #{multilayer_kan_forward.1} parent=5 // pred_fallthru
        _
      %p1189 = scmp.le.s32.totalorder 2, %s18
      // Predicated region
      $region65: #{multilayer_kan_forward.1} parent=5 // pred_check
        %p1190 = pneg %p1189
      $region66: #{multilayer_kan_forward.1} parent=5 // pred_check_branch
        %1192 = sbr.rel (%p1190) target = $region68
      $region67: #{multilayer_kan_forward.1} parent=5 // pred_region
        %s1193 = ssub.s32 %s18, 2
        // Predicated region
        $region69: #{multilayer_kan_forward.1} parent=67 // pred_check
          %p1194 = pneg %p199
        $region70: #{multilayer_kan_forward.1} parent=67 // pred_check_branch
          %1196 = sbr.rel (%p1194) target = $region72
        $region71: #{multilayer_kan_forward.1} parent=67 // pred_region
          %s1197 = sand.u32 %s184, 1
          %s1198 = scalar_lea.sflag [#allocation4], %s1197
          %s1199 = sand.u32 %s184, 1
          %s1200 = smul.addr %s1199, 8
          %s1201 = scalar_lea.vmem [#allocation8], %s1200
          %1202 = dma.done %s1198, 128
        $region72: #{multilayer_kan_forward.1} parent=67 // pred_fallthru
          _
      $region68: #{multilayer_kan_forward.1} parent=5 // pred_fallthru
        _
    $region6: #{multilayer_kan_forward.1} parent=1 // loop_footer
      %s22 = sadd.s32 1, %s18
    $region7: #{multilayer_kan_forward.1} parent=1 // loop_footer_branch
      %17 = sbr.rel target = $region3
    $region8: #{multilayer_kan_forward.1} parent=1 // loop_exit
      _
    %1203 = vsyncpa [#allocation3], 1
    %s1204 = scalar_lea.sflag [#allocation3], 1
    %1205 = vsyncpa %s1204, 1
    %1206 = vsyncpa [#allocation6], 1
    %1207 = vsyncpa [#allocation4], 1
    %s1208 = scalar_lea.sflag [#allocation4], 1
    %1209 = vsyncpa %s1208, 1

</llo_original>
